<compile_context>
chip_gen: v5e
topology: v5e:2x2
jax: 0.10.0
libtpu: 0.0.40
codegen_flags: <defaults>
</compile_context>

<pallas_src>
import functools

import jax
import jax.numpy as jnp
from jax.experimental import pallas as pl
from jax.experimental.pallas import tpu as pltpu


# ----------------------------------------------------------------------------
# In-kernel helpers (operate on values, not refs — everything stays in VMEM)
# ----------------------------------------------------------------------------
def _elu(y):
    # exp is evaluated on a clamped value so the untaken branch never overflows.
    return jnp.where(y > 0, y, jnp.exp(jnp.minimum(y, 0.0)) - 1.0)


def _gat(h, w, a_src, a_dst, bias, adj, sel, heads, out_c):
    """One GATConv (eval mode, add_self_loops already in adj) on dense adj."""
    xw = jnp.dot(h, w, preferred_element_type=jnp.float32)            # (N, H*C)

    if heads == 1:
        s_src = jnp.sum(xw * a_src, axis=-1, keepdims=True)            # (N, 1)
        s_dst = jnp.sum(xw * a_dst, axis=-1, keepdims=True)            # (N, 1)
    else:
        # One MXU matmul per attention vector for all heads at once.
        s_src = jnp.dot(xw * a_src, sel, preferred_element_type=jnp.float32)  # (N, H)
        s_dst = jnp.dot(xw * a_dst, sel, preferred_element_type=jnp.float32)  # (N, H)

    s_src_t = jnp.transpose(s_src)                                      # (H, N): one XLU transpose
    neg_big = jnp.float32(-1e30)

    outs = []
    for hh in range(heads):
        lo = hh * out_c
        e = s_dst[:, hh:hh + 1] + s_src_t[hh:hh + 1, :]                  # (N_dst, N_src)
        e = jnp.where(e > 0, e, 0.2 * e)                                 # LeakyReLU(0.2)
        e = jnp.where(adj > 0, e, neg_big)                               # mask non-edges
        e = e - jnp.max(e, axis=-1, keepdims=True)
        p = jnp.exp(e)                                                   # masked entries underflow to 0
        denom = jnp.sum(p, axis=-1, keepdims=True)                       # >= 1 thanks to self-loops
        attn = p * pl.reciprocal(denom, approx=True)                     # EUP recip instead of divide
        outs.append(jnp.dot(attn, xw[:, lo:lo + out_c],
                            preferred_element_type=jnp.float32))         # (N, C)

    y = outs[0] if heads == 1 else jnp.concatenate(outs, axis=-1)        # lane-dense (N, H*C)
    return _elu(y + bias)


# ----------------------------------------------------------------------------
# Fused kernel: GAT layer 1 -> GAT layer 2 -> global_add_pool -> lin1 -> ELU
#               -> lin2 -> log_softmax
# ----------------------------------------------------------------------------
def _idsgnn_kernel(x_ref, adj_ref, pool_ref, sel1_ref,
                   w1_ref, asrc1_ref, adst1_ref, b1_ref,
                   w2_ref, asrc2_ref, adst2_ref, b2_ref,
                   lw1_ref, lb1_ref, lw2_ref, lb2_ref,
                   out_ref, *, heads1, c1, heads2, c2):
    adj = adj_ref[...]                                                   # (N, N) mask

    # TODO(synk): dropout (p=0.2) layers are identity in eval mode and omitted.
    h = _gat(x_ref[...], w1_ref[...], asrc1_ref[...], adst1_ref[...],
             b1_ref[...], adj, sel1_ref[...], heads1, c1)                # (N, H1*C)
    h = _gat(h, w2_ref[...], asrc2_ref[...], adst2_ref[...],
             b2_ref[...], adj, None, heads2, c2)                         # (N, C)

    pooled = jnp.dot(pool_ref[...], h, preferred_element_type=jnp.float32)  # (G, C)
    z = _elu(jnp.dot(pooled, lw1_ref[...],
                     preferred_element_type=jnp.float32) + lb1_ref[...])
    logits = jnp.dot(z, lw2_ref[...],
                     preferred_element_type=jnp.float32) + lb2_ref[...]

    m = jnp.max(logits, axis=-1, keepdims=True)
    zz = logits - m
    lse = jnp.log(jnp.sum(jnp.exp(zz), axis=-1, keepdims=True))
    out_ref[...] = zz - lse                                              # log_softmax


# ----------------------------------------------------------------------------
# Parameter construction (deterministic) and full forward pass
# ----------------------------------------------------------------------------
def init_params(key, num_features, num_classes, hidden_channels, num_heads,
                num_layers):
    keys = jax.random.split(key, 4 * num_layers + 4)
    params = {"gat": []}
    in_dim = num_features
    for i in range(num_layers):
        heads = 1 if i == num_layers - 1 else num_heads
        out_c = hidden_channels
        kw, ks, kd, _ = keys[4 * i: 4 * i + 4]
        layer = {
            "w": 0.1 * jax.random.normal(kw, (in_dim, heads * out_c), jnp.float32),
            "a_src": 0.1 * jax.random.normal(ks, (1, heads * out_c), jnp.float32),
            "a_dst": 0.1 * jax.random.normal(kd, (1, heads * out_c), jnp.float32),
            "bias": jnp.zeros((1, heads * out_c), jnp.float32),
            "heads": heads,
            "out_channels": out_c,
        }
        params["gat"].append(layer)
        in_dim = heads * out_c
    k1, k2 = keys[-2:]
    params["lin1_w"] = 0.1 * jax.random.normal(
        k1, (hidden_channels, hidden_channels), jnp.float32)
    params["lin1_b"] = jnp.zeros((1, hidden_channels), jnp.float32)
    params["lin2_w"] = 0.1 * jax.random.normal(
        k2, (hidden_channels, num_classes), jnp.float32)
    params["lin2_b"] = jnp.zeros((1, num_classes), jnp.float32)
    return params


def idsgnn_forward(params, x, edge_index, batch, num_graphs):
    n = x.shape[0]
    # Dense adjacency mask: adj[dst, src] = 1 for each edge src->dst, plus self loops.
    adj = jnp.zeros((n, n), jnp.float32)
    adj = adj.at[edge_index[1], edge_index[0]].set(1.0)
    adj = adj.at[jnp.arange(n), jnp.arange(n)].set(1.0)
    # Pooling one-hot: pool[g, n] = 1 if batch[n] == g  (global_add_pool).
    pool = jax.nn.one_hot(batch, num_graphs, dtype=jnp.float32).T        # (G, N)

    l1, l2 = params["gat"]
    h1, c1 = l1["heads"], l1["out_channels"]
    h2, c2 = l2["heads"], l2["out_channels"]
    # Head-selection one-hot (H*C, H): sums each head's C channels in one matmul.
    sel1 = (jnp.arange(h1 * c1)[:, None] // c1
            == jnp.arange(h1)[None, :]).astype(jnp.float32)

    g = num_graphs
    k = params["lin2_w"].shape[1]
    vmem = pl.BlockSpec(memory_space=pltpu.MemorySpace.VMEM)
    kern = functools.partial(_idsgnn_kernel, heads1=h1, c1=c1,
                             heads2=h2, c2=c2)
    # NOTE: at this problem size everything fits in a single full-array VMEM
    # block; for large N this would need a (dst_tile, src_tile) grid with an
    # online softmax (see review), but that is out of scope at N=16.
    return pl.pallas_call(
        kern,
        out_shape=jax.ShapeDtypeStruct((g, k), jnp.float32),
        in_specs=[vmem] * 16,
        out_specs=vmem,
    )(x.astype(jnp.float32), adj, pool, sel1,
      l1["w"], l1["a_src"], l1["a_dst"], l1["bias"],
      l2["w"], l2["a_src"], l2["a_dst"], l2["bias"],
      params["lin1_w"], params["lin1_b"], params["lin2_w"], params["lin2_b"])


if __name__ == "__main__":
    num_features = 16
    num_classes = 4
    hidden_channels = 8
    num_heads = 4
    num_layers = 2
    num_nodes = 16
    num_graphs = 2

    key = jax.random.PRNGKey(0)
    k_param, k_x, k_e = jax.random.split(key, 3)

    params = init_params(k_param, num_features, num_classes, hidden_channels,
                         num_heads, num_layers)

    x = jax.random.normal(k_x, (num_nodes, num_features), jnp.float32)
    # A small deterministic directed edge set (src, dst).
    src = jnp.array([0, 1, 2, 3, 4, 5, 6, 7, 8, 9, 10, 11, 12, 13, 14, 15,
                     0, 3, 5, 9], dtype=jnp.int32)
    dst = jnp.array([1, 2, 3, 0, 5, 6, 7, 4, 9, 10, 11, 8, 13, 14, 15, 12,
                     2, 1, 7, 11], dtype=jnp.int32)
    edge_index = jnp.stack([src, dst], axis=0)            # (2, E)
    batch = jnp.array([0] * 8 + [1] * 8, dtype=jnp.int32)  # nodes -> graph id

    out = idsgnn_forward(params, x, edge_index, batch, num_graphs)
    out = jax.block_until_ready(out)
    assert out.shape == (num_graphs, num_classes)
    print("KERNEL_OK")
</pallas_src>

<mosaic_0001>
module attributes {stable_mosaic.version = 11 : i64} {
  func.func @_idsgnn_kernel(%arg0: memref<16x16xf32, #tpu.memory_space<vmem>>, %arg1: memref<16x16xf32, #tpu.memory_space<vmem>>, %arg2: memref<2x16xf32, #tpu.memory_space<vmem>>, %arg3: memref<32x4xf32, #tpu.memory_space<vmem>>, %arg4: memref<16x32xf32, #tpu.memory_space<vmem>>, %arg5: memref<1x32xf32, #tpu.memory_space<vmem>>, %arg6: memref<1x32xf32, #tpu.memory_space<vmem>>, %arg7: memref<1x32xf32, #tpu.memory_space<vmem>>, %arg8: memref<32x8xf32, #tpu.memory_space<vmem>>, %arg9: memref<1x8xf32, #tpu.memory_space<vmem>>, %arg10: memref<1x8xf32, #tpu.memory_space<vmem>>, %arg11: memref<1x8xf32, #tpu.memory_space<vmem>>, %arg12: memref<8x8xf32, #tpu.memory_space<vmem>>, %arg13: memref<1x8xf32, #tpu.memory_space<vmem>>, %arg14: memref<8x4xf32, #tpu.memory_space<vmem>>, %arg15: memref<1x4xf32, #tpu.memory_space<vmem>>, %arg16: memref<2x4xf32, #tpu.memory_space<vmem>>) attributes {dimension_semantics = [], scalar_prefetch = 0 : i64, scratch_operands = 0 : i64, tpu.core_type = #tpu.core_type<tc>} {
    %c0 = arith.constant 0 : index
    %c0_0 = arith.constant 0 : index
    %0 = vector.load %arg1[%c0, %c0_0] : memref<16x16xf32, #tpu.memory_space<vmem>>, vector<16x16xf32>
    %c0_1 = arith.constant 0 : index
    %c0_2 = arith.constant 0 : index
    %1 = vector.load %arg0[%c0_1, %c0_2] : memref<16x16xf32, #tpu.memory_space<vmem>>, vector<16x16xf32>
    %c0_3 = arith.constant 0 : index
    %c0_4 = arith.constant 0 : index
    %2 = vector.load %arg4[%c0_3, %c0_4] : memref<16x32xf32, #tpu.memory_space<vmem>>, vector<16x32xf32>
    %c0_5 = arith.constant 0 : index
    %c0_6 = arith.constant 0 : index
    %3 = vector.load %arg5[%c0_5, %c0_6] : memref<1x32xf32, #tpu.memory_space<vmem>>, vector<1x32xf32>
    %c0_7 = arith.constant 0 : index
    %c0_8 = arith.constant 0 : index
    %4 = vector.load %arg6[%c0_7, %c0_8] : memref<1x32xf32, #tpu.memory_space<vmem>>, vector<1x32xf32>
    %c0_9 = arith.constant 0 : index
    %c0_10 = arith.constant 0 : index
    %5 = vector.load %arg7[%c0_9, %c0_10] : memref<1x32xf32, #tpu.memory_space<vmem>>, vector<1x32xf32>
    %c0_11 = arith.constant 0 : index
    %c0_12 = arith.constant 0 : index
    %6 = vector.load %arg3[%c0_11, %c0_12] : memref<32x4xf32, #tpu.memory_space<vmem>>, vector<32x4xf32>
    %cst = arith.constant dense<0.000000e+00> : vector<16x32xf32>
    %7 = tpu.matmul %1, %2, %cst {dimension_numbers = #tpu.dot_dimension_numbers<[1], [0], [0], [1], [0, 0, 1, 1], [], []>} : vector<16x16xf32>, vector<16x32xf32>, vector<16x32xf32> -> vector<16x32xf32>
    %8 = vector.broadcast %3 : vector<1x32xf32> to vector<16x32xf32>
    %9 = arith.mulf %7, %8 : vector<16x32xf32>
    %cst_13 = arith.constant dense<0.000000e+00> : vector<16x4xf32>
    %10 = tpu.matmul %9, %6, %cst_13 {dimension_numbers = #tpu.dot_dimension_numbers<[1], [0], [0], [1], [0, 0, 1, 1], [], []>} : vector<16x32xf32>, vector<32x4xf32>, vector<16x4xf32> -> vector<16x4xf32>
    %11 = vector.broadcast %4 : vector<1x32xf32> to vector<16x32xf32>
    %12 = arith.mulf %7, %11 : vector<16x32xf32>
    %cst_14 = arith.constant dense<0.000000e+00> : vector<16x4xf32>
    %13 = tpu.matmul %12, %6, %cst_14 {dimension_numbers = #tpu.dot_dimension_numbers<[1], [0], [0], [1], [0, 0, 1, 1], [], []>} : vector<16x32xf32>, vector<32x4xf32>, vector<16x4xf32> -> vector<16x4xf32>
    %14 = tpu.transpose %10, [1, 0] : vector<16x4xf32> -> vector<4x16xf32>
    %15 = vector.extract_strided_slice %13 {offsets = [0, 0], sizes = [16, 1], strides = [1, 1]} : vector<16x4xf32> to vector<16x1xf32>
    %16 = vector.extract_strided_slice %14 {offsets = [0, 0], sizes = [1, 16], strides = [1, 1]} : vector<4x16xf32> to vector<1x16xf32>
    %17 = vector.broadcast %15 : vector<16x1xf32> to vector<16x16xf32>
    %18 = vector.broadcast %16 : vector<1x16xf32> to vector<16x16xf32>
    %19 = arith.addf %17, %18 : vector<16x16xf32>
    %cst_15 = arith.constant 0.000000e+00 : f32
    %20 = vector.broadcast %cst_15 : f32 to vector<16x16xf32>
    %21 = arith.cmpf ogt, %19, %20 : vector<16x16xf32>
    %cst_16 = arith.constant 2.000000e-01 : f32
    %22 = vector.broadcast %cst_16 : f32 to vector<16x16xf32>
    %23 = arith.mulf %22, %19 : vector<16x16xf32>
    %24 = arith.select %21, %19, %23 : vector<16x16xi1>, vector<16x16xf32>
    %cst_17 = arith.constant 0.000000e+00 : f32
    %25 = vector.broadcast %cst_17 : f32 to vector<16x16xf32>
    %26 = arith.cmpf ogt, %0, %25 : vector<16x16xf32>
    %cst_18 = arith.constant -1.000000e+30 : f32
    %27 = vector.broadcast %cst_18 : f32 to vector<16x16xf32>
    %28 = arith.select %26, %24, %27 : vector<16x16xi1>, vector<16x16xf32>
    %cst_19 = arith.constant dense<0xFF800000> : vector<16xf32>
    %29 = vector.multi_reduction <maximumf>, %28, %cst_19 [1] : vector<16x16xf32> to vector<16xf32>
    %30 = vector.shape_cast %29 : vector<16xf32> to vector<16x1xf32>
    %31 = vector.broadcast %30 : vector<16x1xf32> to vector<16x16xf32>
    %32 = arith.subf %28, %31 : vector<16x16xf32>
    %33 = math.exp %32 : vector<16x16xf32>
    %cst_20 = arith.constant dense<0.000000e+00> : vector<16xf32>
    %34 = vector.multi_reduction <add>, %33, %cst_20 [1] : vector<16x16xf32> to vector<16xf32>
    %35 = vector.shape_cast %34 : vector<16xf32> to vector<16x1xf32>
    %36 = tpu.reciprocal %35 {approx = true} : vector<16x1xf32> -> vector<16x1xf32>
    %37 = vector.broadcast %36 : vector<16x1xf32> to vector<16x16xf32>
    %38 = arith.mulf %33, %37 : vector<16x16xf32>
    %39 = vector.extract_strided_slice %7 {offsets = [0, 0], sizes = [16, 8], strides = [1, 1]} : vector<16x32xf32> to vector<16x8xf32>
    %cst_21 = arith.constant dense<0.000000e+00> : vector<16x8xf32>
    %40 = tpu.matmul %38, %39, %cst_21 {dimension_numbers = #tpu.dot_dimension_numbers<[1], [0], [0], [1], [0, 0, 1, 1], [], []>} : vector<16x16xf32>, vector<16x8xf32>, vector<16x8xf32> -> vector<16x8xf32>
    %41 = vector.extract_strided_slice %13 {offsets = [0, 1], sizes = [16, 1], strides = [1, 1]} : vector<16x4xf32> to vector<16x1xf32>
    %42 = vector.extract_strided_slice %14 {offsets = [1, 0], sizes = [1, 16], strides = [1, 1]} : vector<4x16xf32> to vector<1x16xf32>
    %43 = vector.broadcast %41 : vector<16x1xf32> to vector<16x16xf32>
    %44 = vector.broadcast %42 : vector<1x16xf32> to vector<16x16xf32>
    %45 = arith.addf %43, %44 : vector<16x16xf32>
    %cst_22 = arith.constant 0.000000e+00 : f32
    %46 = vector.broadcast %cst_22 : f32 to vector<16x16xf32>
    %47 = arith.cmpf ogt, %45, %46 : vector<16x16xf32>
    %cst_23 = arith.constant 2.000000e-01 : f32
    %48 = vector.broadcast %cst_23 : f32 to vector<16x16xf32>
    %49 = arith.mulf %48, %45 : vector<16x16xf32>
    %50 = arith.select %47, %45, %49 : vector<16x16xi1>, vector<16x16xf32>
    %cst_24 = arith.constant 0.000000e+00 : f32
    %51 = vector.broadcast %cst_24 : f32 to vector<16x16xf32>
    %52 = arith.cmpf ogt, %0, %51 : vector<16x16xf32>
    %cst_25 = arith.constant -1.000000e+30 : f32
    %53 = vector.broadcast %cst_25 : f32 to vector<16x16xf32>
    %54 = arith.select %52, %50, %53 : vector<16x16xi1>, vector<16x16xf32>
    %cst_26 = arith.constant dense<0xFF800000> : vector<16xf32>
    %55 = vector.multi_reduction <maximumf>, %54, %cst_26 [1] : vector<16x16xf32> to vector<16xf32>
    %56 = vector.shape_cast %55 : vector<16xf32> to vector<16x1xf32>
    %57 = vector.broadcast %56 : vector<16x1xf32> to vector<16x16xf32>
    %58 = arith.subf %54, %57 : vector<16x16xf32>
    %59 = math.exp %58 : vector<16x16xf32>
    %cst_27 = arith.constant dense<0.000000e+00> : vector<16xf32>
    %60 = vector.multi_reduction <add>, %59, %cst_27 [1] : vector<16x16xf32> to vector<16xf32>
    %61 = vector.shape_cast %60 : vector<16xf32> to vector<16x1xf32>
    %62 = tpu.reciprocal %61 {approx = true} : vector<16x1xf32> -> vector<16x1xf32>
    %63 = vector.broadcast %62 : vector<16x1xf32> to vector<16x16xf32>
    %64 = arith.mulf %59, %63 : vector<16x16xf32>
    %65 = vector.extract_strided_slice %7 {offsets = [0, 8], sizes = [16, 8], strides = [1, 1]} : vector<16x32xf32> to vector<16x8xf32>
    %cst_28 = arith.constant dense<0.000000e+00> : vector<16x8xf32>
    %66 = tpu.matmul %64, %65, %cst_28 {dimension_numbers = #tpu.dot_dimension_numbers<[1], [0], [0], [1], [0, 0, 1, 1], [], []>} : vector<16x16xf32>, vector<16x8xf32>, vector<16x8xf32> -> vector<16x8xf32>
    %67 = vector.extract_strided_slice %13 {offsets = [0, 2], sizes = [16, 1], strides = [1, 1]} : vector<16x4xf32> to vector<16x1xf32>
    %68 = vector.extract_strided_slice %14 {offsets = [2, 0], sizes = [1, 16], strides = [1, 1]} : vector<4x16xf32> to vector<1x16xf32>
    %69 = vector.broadcast %67 : vector<16x1xf32> to vector<16x16xf32>
    %70 = vector.broadcast %68 : vector<1x16xf32> to vector<16x16xf32>
    %71 = arith.addf %69, %70 : vector<16x16xf32>
    %cst_29 = arith.constant 0.000000e+00 : f32
    %72 = vector.broadcast %cst_29 : f32 to vector<16x16xf32>
    %73 = arith.cmpf ogt, %71, %72 : vector<16x16xf32>
    %cst_30 = arith.constant 2.000000e-01 : f32
    %74 = vector.broadcast %cst_30 : f32 to vector<16x16xf32>
    %75 = arith.mulf %74, %71 : vector<16x16xf32>
    %76 = arith.select %73, %71, %75 : vector<16x16xi1>, vector<16x16xf32>
    %cst_31 = arith.constant 0.000000e+00 : f32
    %77 = vector.broadcast %cst_31 : f32 to vector<16x16xf32>
    %78 = arith.cmpf ogt, %0, %77 : vector<16x16xf32>
    %cst_32 = arith.constant -1.000000e+30 : f32
    %79 = vector.broadcast %cst_32 : f32 to vector<16x16xf32>
    %80 = arith.select %78, %76, %79 : vector<16x16xi1>, vector<16x16xf32>
    %cst_33 = arith.constant dense<0xFF800000> : vector<16xf32>
    %81 = vector.multi_reduction <maximumf>, %80, %cst_33 [1] : vector<16x16xf32> to vector<16xf32>
    %82 = vector.shape_cast %81 : vector<16xf32> to vector<16x1xf32>
    %83 = vector.broadcast %82 : vector<16x1xf32> to vector<16x16xf32>
    %84 = arith.subf %80, %83 : vector<16x16xf32>
    %85 = math.exp %84 : vector<16x16xf32>
    %cst_34 = arith.constant dense<0.000000e+00> : vector<16xf32>
    %86 = vector.multi_reduction <add>, %85, %cst_34 [1] : vector<16x16xf32> to vector<16xf32>
    %87 = vector.shape_cast %86 : vector<16xf32> to vector<16x1xf32>
    %88 = tpu.reciprocal %87 {approx = true} : vector<16x1xf32> -> vector<16x1xf32>
    %89 = vector.broadcast %88 : vector<16x1xf32> to vector<16x16xf32>
    %90 = arith.mulf %85, %89 : vector<16x16xf32>
    %91 = vector.extract_strided_slice %7 {offsets = [0, 16], sizes = [16, 8], strides = [1, 1]} : vector<16x32xf32> to vector<16x8xf32>
    %cst_35 = arith.constant dense<0.000000e+00> : vector<16x8xf32>
    %92 = tpu.matmul %90, %91, %cst_35 {dimension_numbers = #tpu.dot_dimension_numbers<[1], [0], [0], [1], [0, 0, 1, 1], [], []>} : vector<16x16xf32>, vector<16x8xf32>, vector<16x8xf32> -> vector<16x8xf32>
    %93 = vector.extract_strided_slice %13 {offsets = [0, 3], sizes = [16, 1], strides = [1, 1]} : vector<16x4xf32> to vector<16x1xf32>
    %94 = vector.extract_strided_slice %14 {offsets = [3, 0], sizes = [1, 16], strides = [1, 1]} : vector<4x16xf32> to vector<1x16xf32>
    %95 = vector.broadcast %93 : vector<16x1xf32> to vector<16x16xf32>
    %96 = vector.broadcast %94 : vector<1x16xf32> to vector<16x16xf32>
    %97 = arith.addf %95, %96 : vector<16x16xf32>
    %cst_36 = arith.constant 0.000000e+00 : f32
    %98 = vector.broadcast %cst_36 : f32 to vector<16x16xf32>
    %99 = arith.cmpf ogt, %97, %98 : vector<16x16xf32>
    %cst_37 = arith.constant 2.000000e-01 : f32
    %100 = vector.broadcast %cst_37 : f32 to vector<16x16xf32>
    %101 = arith.mulf %100, %97 : vector<16x16xf32>
    %102 = arith.select %99, %97, %101 : vector<16x16xi1>, vector<16x16xf32>
    %cst_38 = arith.constant 0.000000e+00 : f32
    %103 = vector.broadcast %cst_38 : f32 to vector<16x16xf32>
    %104 = arith.cmpf ogt, %0, %103 : vector<16x16xf32>
    %cst_39 = arith.constant -1.000000e+30 : f32
    %105 = vector.broadcast %cst_39 : f32 to vector<16x16xf32>
    %106 = arith.select %104, %102, %105 : vector<16x16xi1>, vector<16x16xf32>
    %cst_40 = arith.constant dense<0xFF800000> : vector<16xf32>
    %107 = vector.multi_reduction <maximumf>, %106, %cst_40 [1] : vector<16x16xf32> to vector<16xf32>
    %108 = vector.shape_cast %107 : vector<16xf32> to vector<16x1xf32>
    %109 = vector.broadcast %108 : vector<16x1xf32> to vector<16x16xf32>
    %110 = arith.subf %106, %109 : vector<16x16xf32>
    %111 = math.exp %110 : vector<16x16xf32>
    %cst_41 = arith.constant dense<0.000000e+00> : vector<16xf32>
    %112 = vector.multi_reduction <add>, %111, %cst_41 [1] : vector<16x16xf32> to vector<16xf32>
    %113 = vector.shape_cast %112 : vector<16xf32> to vector<16x1xf32>
    %114 = tpu.reciprocal %113 {approx = true} : vector<16x1xf32> -> vector<16x1xf32>
    %115 = vector.broadcast %114 : vector<16x1xf32> to vector<16x16xf32>
    %116 = arith.mulf %111, %115 : vector<16x16xf32>
    %117 = vector.extract_strided_slice %7 {offsets = [0, 24], sizes = [16, 8], strides = [1, 1]} : vector<16x32xf32> to vector<16x8xf32>
    %cst_42 = arith.constant dense<0.000000e+00> : vector<16x8xf32>
    %118 = tpu.matmul %116, %117, %cst_42 {dimension_numbers = #tpu.dot_dimension_numbers<[1], [0], [0], [1], [0, 0, 1, 1], [], []>} : vector<16x16xf32>, vector<16x8xf32>, vector<16x8xf32> -> vector<16x8xf32>
    %119 = tpu.concatenate %40, %66, %92, %118 in 1 : vector<16x8xf32>, vector<16x8xf32>, vector<16x8xf32>, vector<16x8xf32> -> vector<16x32xf32>
    %120 = vector.broadcast %5 : vector<1x32xf32> to vector<16x32xf32>
    %121 = arith.addf %119, %120 : vector<16x32xf32>
    %cst_43 = arith.constant 0.000000e+00 : f32
    %122 = vector.broadcast %cst_43 : f32 to vector<16x32xf32>
    %123 = arith.cmpf ogt, %121, %122 : vector<16x32xf32>
    %cst_44 = arith.constant 0.000000e+00 : f32
    %124 = vector.broadcast %cst_44 : f32 to vector<16x32xf32>
    %125 = arith.minimumf %121, %124 : vector<16x32xf32>
    %126 = math.exp %125 : vector<16x32xf32>
    %cst_45 = arith.constant 1.000000e+00 : f32
    %127 = vector.broadcast %cst_45 : f32 to vector<16x32xf32>
    %128 = arith.subf %126, %127 : vector<16x32xf32>
    %129 = arith.select %123, %121, %128 : vector<16x32xi1>, vector<16x32xf32>
    %c0_46 = arith.constant 0 : index
    %c0_47 = arith.constant 0 : index
    %130 = vector.load %arg8[%c0_46, %c0_47] : memref<32x8xf32, #tpu.memory_space<vmem>>, vector<32x8xf32>
    %c0_48 = arith.constant 0 : index
    %c0_49 = arith.constant 0 : index
    %131 = vector.load %arg9[%c0_48, %c0_49] : memref<1x8xf32, #tpu.memory_space<vmem>>, vector<1x8xf32>
    %c0_50 = arith.constant 0 : index
    %c0_51 = arith.constant 0 : index
    %132 = vector.load %arg10[%c0_50, %c0_51] : memref<1x8xf32, #tpu.memory_space<vmem>>, vector<1x8xf32>
    %c0_52 = arith.constant 0 : index
    %c0_53 = arith.constant 0 : index
    %133 = vector.load %arg11[%c0_52, %c0_53] : memref<1x8xf32, #tpu.memory_space<vmem>>, vector<1x8xf32>
    %cst_54 = arith.constant dense<0.000000e+00> : vector<16x8xf32>
    %134 = tpu.matmul %129, %130, %cst_54 {dimension_numbers = #tpu.dot_dimension_numbers<[1], [0], [0], [1], [0, 0, 1, 1], [], []>} : vector<16x32xf32>, vector<32x8xf32>, vector<16x8xf32> -> vector<16x8xf32>
    %135 = vector.broadcast %131 : vector<1x8xf32> to vector<16x8xf32>
    %136 = arith.mulf %134, %135 : vector<16x8xf32>
    %cst_55 = arith.constant dense<0.000000e+00> : vector<16xf32>
    %137 = vector.multi_reduction <add>, %136, %cst_55 [1] : vector<16x8xf32> to vector<16xf32>
    %138 = vector.shape_cast %137 : vector<16xf32> to vector<16x1xf32>
    %139 = vector.broadcast %132 : vector<1x8xf32> to vector<16x8xf32>
    %140 = arith.mulf %134, %139 : vector<16x8xf32>
    %cst_56 = arith.constant dense<0.000000e+00> : vector<16xf32>
    %141 = vector.multi_reduction <add>, %140, %cst_56 [1] : vector<16x8xf32> to vector<16xf32>
    %142 = vector.shape_cast %141 : vector<16xf32> to vector<16x1xf32>
    %143 = tpu.transpose %138, [1, 0] : vector<16x1xf32> -> vector<1x16xf32>
    %144 = vector.broadcast %142 : vector<16x1xf32> to vector<16x16xf32>
    %145 = vector.broadcast %143 : vector<1x16xf32> to vector<16x16xf32>
    %146 = arith.addf %144, %145 : vector<16x16xf32>
    %cst_57 = arith.constant 0.000000e+00 : f32
    %147 = vector.broadcast %cst_57 : f32 to vector<16x16xf32>
    %148 = arith.cmpf ogt, %146, %147 : vector<16x16xf32>
    %cst_58 = arith.constant 2.000000e-01 : f32
    %149 = vector.broadcast %cst_58 : f32 to vector<16x16xf32>
    %150 = arith.mulf %149, %146 : vector<16x16xf32>
    %151 = arith.select %148, %146, %150 : vector<16x16xi1>, vector<16x16xf32>
    %cst_59 = arith.constant 0.000000e+00 : f32
    %152 = vector.broadcast %cst_59 : f32 to vector<16x16xf32>
    %153 = arith.cmpf ogt, %0, %152 : vector<16x16xf32>
    %cst_60 = arith.constant -1.000000e+30 : f32
    %154 = vector.broadcast %cst_60 : f32 to vector<16x16xf32>
    %155 = arith.select %153, %151, %154 : vector<16x16xi1>, vector<16x16xf32>
    %cst_61 = arith.constant dense<0xFF800000> : vector<16xf32>
    %156 = vector.multi_reduction <maximumf>, %155, %cst_61 [1] : vector<16x16xf32> to vector<16xf32>
    %157 = vector.shape_cast %156 : vector<16xf32> to vector<16x1xf32>
    %158 = vector.broadcast %157 : vector<16x1xf32> to vector<16x16xf32>
    %159 = arith.subf %155, %158 : vector<16x16xf32>
    %160 = math.exp %159 : vector<16x16xf32>
    %cst_62 = arith.constant dense<0.000000e+00> : vector<16xf32>
    %161 = vector.multi_reduction <add>, %160, %cst_62 [1] : vector<16x16xf32> to vector<16xf32>
    %162 = vector.shape_cast %161 : vector<16xf32> to vector<16x1xf32>
    %163 = tpu.reciprocal %162 {approx = true} : vector<16x1xf32> -> vector<16x1xf32>
    %164 = vector.broadcast %163 : vector<16x1xf32> to vector<16x16xf32>
    %165 = arith.mulf %160, %164 : vector<16x16xf32>
    %cst_63 = arith.constant dense<0.000000e+00> : vector<16x8xf32>
    %166 = tpu.matmul %165, %134, %cst_63 {dimension_numbers = #tpu.dot_dimension_numbers<[1], [0], [0], [1], [0, 0, 1, 1], [], []>} : vector<16x16xf32>, vector<16x8xf32>, vector<16x8xf32> -> vector<16x8xf32>
    %167 = vector.broadcast %133 : vector<1x8xf32> to vector<16x8xf32>
    %168 = arith.addf %166, %167 : vector<16x8xf32>
    %cst_64 = arith.constant 0.000000e+00 : f32
    %169 = vector.broadcast %cst_64 : f32 to vector<16x8xf32>
    %170 = arith.cmpf ogt, %168, %169 : vector<16x8xf32>
    %cst_65 = arith.constant 0.000000e+00 : f32
    %171 = vector.broadcast %cst_65 : f32 to vector<16x8xf32>
    %172 = arith.minimumf %168, %171 : vector<16x8xf32>
    %173 = math.exp %172 : vector<16x8xf32>
    %cst_66 = arith.constant 1.000000e+00 : f32
    %174 = vector.broadcast %cst_66 : f32 to vector<16x8xf32>
    %175 = arith.subf %173, %174 : vector<16x8xf32>
    %176 = arith.select %170, %168, %175 : vector<16x8xi1>, vector<16x8xf32>
    %c0_67 = arith.constant 0 : index
    %c0_68 = arith.constant 0 : index
    %177 = vector.load %arg2[%c0_67, %c0_68] : memref<2x16xf32, #tpu.memory_space<vmem>>, vector<2x16xf32>
    %cst_69 = arith.constant dense<0.000000e+00> : vector<2x8xf32>
    %178 = tpu.matmul %177, %176, %cst_69 {dimension_numbers = #tpu.dot_dimension_numbers<[1], [0], [0], [1], [0, 0, 1, 1], [], []>} : vector<2x16xf32>, vector<16x8xf32>, vector<2x8xf32> -> vector<2x8xf32>
    %c0_70 = arith.constant 0 : index
    %c0_71 = arith.constant 0 : index
    %179 = vector.load %arg12[%c0_70, %c0_71] : memref<8x8xf32, #tpu.memory_space<vmem>>, vector<8x8xf32>
    %cst_72 = arith.constant dense<0.000000e+00> : vector<2x8xf32>
    %180 = tpu.matmul %178, %179, %cst_72 {dimension_numbers = #tpu.dot_dimension_numbers<[1], [0], [0], [1], [0, 0, 1, 1], [], []>} : vector<2x8xf32>, vector<8x8xf32>, vector<2x8xf32> -> vector<2x8xf32>
    %c0_73 = arith.constant 0 : index
    %c0_74 = arith.constant 0 : index
    %181 = vector.load %arg13[%c0_73, %c0_74] : memref<1x8xf32, #tpu.memory_space<vmem>>, vector<1x8xf32>
    %182 = vector.broadcast %181 : vector<1x8xf32> to vector<2x8xf32>
    %183 = arith.addf %180, %182 : vector<2x8xf32>
    %cst_75 = arith.constant 0.000000e+00 : f32
    %184 = vector.broadcast %cst_75 : f32 to vector<2x8xf32>
    %185 = arith.cmpf ogt, %183, %184 : vector<2x8xf32>
    %cst_76 = arith.constant 0.000000e+00 : f32
    %186 = vector.broadcast %cst_76 : f32 to vector<2x8xf32>
    %187 = arith.minimumf %183, %186 : vector<2x8xf32>
    %188 = math.exp %187 : vector<2x8xf32>
    %cst_77 = arith.constant 1.000000e+00 : f32
    %189 = vector.broadcast %cst_77 : f32 to vector<2x8xf32>
    %190 = arith.subf %188, %189 : vector<2x8xf32>
    %191 = arith.select %185, %183, %190 : vector<2x8xi1>, vector<2x8xf32>
    %c0_78 = arith.constant 0 : index
    %c0_79 = arith.constant 0 : index
    %192 = vector.load %arg14[%c0_78, %c0_79] : memref<8x4xf32, #tpu.memory_space<vmem>>, vector<8x4xf32>
    %cst_80 = arith.constant dense<0.000000e+00> : vector<2x4xf32>
    %193 = tpu.matmul %191, %192, %cst_80 {dimension_numbers = #tpu.dot_dimension_numbers<[1], [0], [0], [1], [0, 0, 1, 1], [], []>} : vector<2x8xf32>, vector<8x4xf32>, vector<2x4xf32> -> vector<2x4xf32>
    %c0_81 = arith.constant 0 : index
    %c0_82 = arith.constant 0 : index
    %194 = vector.load %arg15[%c0_81, %c0_82] : memref<1x4xf32, #tpu.memory_space<vmem>>, vector<1x4xf32>
    %195 = vector.broadcast %194 : vector<1x4xf32> to vector<2x4xf32>
    %196 = arith.addf %193, %195 : vector<2x4xf32>
    %cst_83 = arith.constant dense<0xFF800000> : vector<2xf32>
    %197 = vector.multi_reduction <maximumf>, %196, %cst_83 [1] : vector<2x4xf32> to vector<2xf32>
    %198 = vector.shape_cast %197 : vector<2xf32> to vector<2x1xf32>
    %199 = vector.broadcast %198 : vector<2x1xf32> to vector<2x4xf32>
    %200 = arith.subf %196, %199 : vector<2x4xf32>
    %201 = math.exp %200 : vector<2x4xf32>
    %cst_84 = arith.constant dense<0.000000e+00> : vector<2xf32>
    %202 = vector.multi_reduction <add>, %201, %cst_84 [1] : vector<2x4xf32> to vector<2xf32>
    %203 = vector.shape_cast %202 : vector<2xf32> to vector<2x1xf32>
    %204 = math.log %203 : vector<2x1xf32>
    %205 = vector.broadcast %204 : vector<2x1xf32> to vector<2x4xf32>
    %206 = arith.subf %200, %205 : vector<2x4xf32>
    %c0_85 = arith.constant 0 : index
    %c0_86 = arith.constant 0 : index
    %207 = vector.load %arg16[%c0_85, %c0_86] : memref<2x4xf32, #tpu.memory_space<vmem>>, vector<2x4xf32>
    tpu.vector_store %arg16[%c0_85, %c0_86], %206 {strides = array<i32>} : memref<2x4xf32, #tpu.memory_space<vmem>>, vector<2x4xf32>,
    return
  }
}

</mosaic_0001>

<llo_original>
// kernel: tpu_custom_call.1
$region0: #{tpu_custom_call.1}
  #allocation0 [shape = 'u32[]', space=smem, size = 0x4, offset = 0x4, fixed_abs, tag = 'smem constant byte address 0x4 - core index']
  #allocation1 [shape = 'u32[72,128]{1,0:T(1,128)}', space=vmem, size = 0x9000, scoped, tag = 'internal scratch']
  %s0 = inlined_call_operand.vmem [shape: f32[16,16], index: 0, kind: input, shape index: {}]
  %s1 = inlined_call_operand.vmem [shape: f32[16,16], index: 1, kind: input, shape index: {}]
  %s2 = inlined_call_operand.vmem [shape: f32[2,16], index: 2, kind: input, shape index: {}]
  %s3 = inlined_call_operand.vmem [shape: f32[32,4], index: 3, kind: input, shape index: {}]
  %s4 = inlined_call_operand.vmem [shape: f32[16,32], index: 4, kind: input, shape index: {}]
  %s5 = inlined_call_operand.vmem [shape: f32[1,32], index: 5, kind: input, shape index: {}]
  %s6 = inlined_call_operand.vmem [shape: f32[1,32], index: 6, kind: input, shape index: {}]
  %s7 = inlined_call_operand.vmem [shape: f32[1,32], index: 7, kind: input, shape index: {}]
  %s8 = inlined_call_operand.vmem [shape: f32[32,8], index: 8, kind: input, shape index: {}]
  %s9 = inlined_call_operand.vmem [shape: f32[1,8], index: 9, kind: input, shape index: {}]
  %s10 = inlined_call_operand.vmem [shape: f32[1,8], index: 10, kind: input, shape index: {}]
  %s11 = inlined_call_operand.vmem [shape: f32[1,8], index: 11, kind: input, shape index: {}]
  %s12 = inlined_call_operand.vmem [shape: f32[8,8], index: 12, kind: input, shape index: {}]
  %s13 = inlined_call_operand.vmem [shape: f32[1,8], index: 13, kind: input, shape index: {}]
  %s14 = inlined_call_operand.vmem [shape: f32[8,4], index: 14, kind: input, shape index: {}]
  %s15 = inlined_call_operand.vmem [shape: f32[1,4], index: 15, kind: input, shape index: {}]
  %s16 = inlined_call_operand.hbm [shape: f32[2,4], index: 16, kind: output, shape index: {}]
  %s17 = sld [smem:[#allocation0]]
  $region74: #{tpu_custom_call.1} parent=0
    _
  %s19 = ssub.s32 1, %s17
  %s20 = scalar_select 0, %s19, %s17
  $region1: #{tpu_custom_call.1} parent=0
    #allocation2 [shape = 'u8[1024]{0}', space=vmem, size = 0x400, scoped, tag = 'output window, operand 0, single buffered']
    #allocation3 [shape = 's32[1]{0}', space=sflag, size = 0x4, scoped, tag = 'scoped memory for tpu_custom_call.1']
    %21 = vsyncpa [#allocation3], 0
    // Predicated region
    $region2: #{tpu_custom_call.1} parent=1 // pred_check
      _
    $region3: #{tpu_custom_call.1} parent=1 // pred_check_branch
      %23 = sbr.rel (0) target = $region5
    $region4: #{tpu_custom_call.1} parent=1 // pred_region
      _
    $region5: #{tpu_custom_call.1} parent=1 // pred_fallthru
      _
    // Predicated region
    $region6: #{tpu_custom_call.1} parent=1 // pred_check
      _
    $region7: #{tpu_custom_call.1} parent=1 // pred_check_branch
      %25 = sbr.rel (0) target = $region9
    $region8: #{tpu_custom_call.1} parent=1 // pred_region
      _
    $region9: #{tpu_custom_call.1} parent=1 // pred_fallthru
      _
    // Predicated region
    $region10: #{tpu_custom_call.1} parent=1 // pred_check
      _
    $region11: #{tpu_custom_call.1} parent=1 // pred_check_branch
      %27 = sbr.rel (0) target = $region13
    $region12: #{tpu_custom_call.1} parent=1 // pred_region
      _
    $region13: #{tpu_custom_call.1} parent=1 // pred_fallthru
      _
    // Predicated region
    $region14: #{tpu_custom_call.1} parent=1 // pred_check
      _
    $region15: #{tpu_custom_call.1} parent=1 // pred_check_branch
      %29 = sbr.rel (0) target = $region17
    $region16: #{tpu_custom_call.1} parent=1 // pred_region
      _
    $region17: #{tpu_custom_call.1} parent=1 // pred_fallthru
      _
    // Predicated region
    $region18: #{tpu_custom_call.1} parent=1 // pred_check
      _
    $region19: #{tpu_custom_call.1} parent=1 // pred_check_branch
      %31 = sbr.rel (0) target = $region21
    $region20: #{tpu_custom_call.1} parent=1 // pred_region
      _
    $region21: #{tpu_custom_call.1} parent=1 // pred_fallthru
      _
    // Predicated region
    $region22: #{tpu_custom_call.1} parent=1 // pred_check
      _
    $region23: #{tpu_custom_call.1} parent=1 // pred_check_branch
      %33 = sbr.rel (0) target = $region25
    $region24: #{tpu_custom_call.1} parent=1 // pred_region
      _
    $region25: #{tpu_custom_call.1} parent=1 // pred_fallthru
      _
    // Predicated region
    $region26: #{tpu_custom_call.1} parent=1 // pred_check
      _
    $region27: #{tpu_custom_call.1} parent=1 // pred_check_branch
      %35 = sbr.rel (0) target = $region29
    $region28: #{tpu_custom_call.1} parent=1 // pred_region
      _
    $region29: #{tpu_custom_call.1} parent=1 // pred_fallthru
      _
    // Predicated region
    $region30: #{tpu_custom_call.1} parent=1 // pred_check
      _
    $region31: #{tpu_custom_call.1} parent=1 // pred_check_branch
      %37 = sbr.rel (0) target = $region33
    $region32: #{tpu_custom_call.1} parent=1 // pred_region
      _
    $region33: #{tpu_custom_call.1} parent=1 // pred_fallthru
      _
    // Predicated region
    $region34: #{tpu_custom_call.1} parent=1 // pred_check
      _
    $region35: #{tpu_custom_call.1} parent=1 // pred_check_branch
      %39 = sbr.rel (0) target = $region37
    $region36: #{tpu_custom_call.1} parent=1 // pred_region
      _
    $region37: #{tpu_custom_call.1} parent=1 // pred_fallthru
      _
    // Predicated region
    $region38: #{tpu_custom_call.1} parent=1 // pred_check
      _
    $region39: #{tpu_custom_call.1} parent=1 // pred_check_branch
      %41 = sbr.rel (0) target = $region41
    $region40: #{tpu_custom_call.1} parent=1 // pred_region
      _
    $region41: #{tpu_custom_call.1} parent=1 // pred_fallthru
      _
    // Predicated region
    $region42: #{tpu_custom_call.1} parent=1 // pred_check
      _
    $region43: #{tpu_custom_call.1} parent=1 // pred_check_branch
      %43 = sbr.rel (0) target = $region45
    $region44: #{tpu_custom_call.1} parent=1 // pred_region
      _
    $region45: #{tpu_custom_call.1} parent=1 // pred_fallthru
      _
    // Predicated region
    $region46: #{tpu_custom_call.1} parent=1 // pred_check
      _
    $region47: #{tpu_custom_call.1} parent=1 // pred_check_branch
      %45 = sbr.rel (0) target = $region49
    $region48: #{tpu_custom_call.1} parent=1 // pred_region
      _
    $region49: #{tpu_custom_call.1} parent=1 // pred_fallthru
      _
    // Predicated region
    $region50: #{tpu_custom_call.1} parent=1 // pred_check
      _
    $region51: #{tpu_custom_call.1} parent=1 // pred_check_branch
      %47 = sbr.rel (0) target = $region53
    $region52: #{tpu_custom_call.1} parent=1 // pred_region
      _
    $region53: #{tpu_custom_call.1} parent=1 // pred_fallthru
      _
    // Predicated region
    $region54: #{tpu_custom_call.1} parent=1 // pred_check
      _
    $region55: #{tpu_custom_call.1} parent=1 // pred_check_branch
      %49 = sbr.rel (0) target = $region57
    $region56: #{tpu_custom_call.1} parent=1 // pred_region
      _
    $region57: #{tpu_custom_call.1} parent=1 // pred_fallthru
      _
    // Predicated region
    $region58: #{tpu_custom_call.1} parent=1 // pred_check
      _
    $region59: #{tpu_custom_call.1} parent=1 // pred_check_branch
      %51 = sbr.rel (0) target = $region61
    $region60: #{tpu_custom_call.1} parent=1 // pred_region
      _
    $region61: #{tpu_custom_call.1} parent=1 // pred_fallthru
      _
    // Predicated region
    $region62: #{tpu_custom_call.1} parent=1 // pred_check
      _
    $region63: #{tpu_custom_call.1} parent=1 // pred_check_branch
      %53 = sbr.rel (0) target = $region65
    $region64: #{tpu_custom_call.1} parent=1 // pred_region
      _
    $region65: #{tpu_custom_call.1} parent=1 // pred_fallthru
      _
    %v54 = vld [vmem:[%s1] sm:$0xff]
    %v55 = vld [vmem:[%s1 + $0x8] sm:$0xff]
    %v56 = vld [vmem:[%s0] sm:$0xff]
    %v57 = vld [vmem:[%s0 + $0x8] sm:$0xff]
    %v58 = vld [vmem:[%s4] sm:$0xff]
    %v59 = vld [vmem:[%s4 + $0x8] sm:$0xff]
    %v60 = vld [vmem:[%s5] sm:$0x1]
    %v61 = vld [vmem:[%s6] sm:$0x1]
    %v62 = vld [vmem:[%s7] sm:$0x1]
    %v63 = vld [vmem:[%s3] sm:$0xff]
    %v64 = vld [vmem:[%s3 + $0x8] sm:$0xff]
    %v65 = vld [vmem:[%s3 + $0x10] sm:$0xff]
    %v66 = vld [vmem:[%s3 + $0x18] sm:$0xff]
    %vm67 = vcmask 130048
    %v69 = vsel %vm67, %v56, 0
    %v72 = vsel %vm67, %v57, 0
    %74 = vmatpush.msra.mxu0 0.0
    %75 = vmatpush.msra.mxu0 0.0
    %76 = vmatpush.msra.mxu0 0.0
    %77 = vmatpush.msra.mxu0 0.0
    %78 = vmatpush.msra.mxu0 0.0
    %79 = vmatpush.msra.mxu0 0.0
    %80 = vmatpush.msra.mxu0 0.0
    %81 = vmatpush.msra.mxu0 0.0
    %82 = vmatpush.msra.mxu0 0.0
    %83 = vmatpush.msra.mxu0 0.0
    %84 = vmatpush.msra.mxu0 0.0
    %85 = vmatpush.msra.mxu0 0.0
    %86 = vmatpush.msra.mxu0 0.0
    %87 = vmatpush.msra.mxu0 0.0
    %88 = vmatpush.msra.mxu0 %v59
    %89 = vmatpush.msra.mxu0 %v58
    %90 = vmatmul.f32.gmra.mxu0 %v69
    %v91 = vpop.f32.mrf.mxu0
    %v92 = vadd.f32 0.0, %v91
    %93 = vmatmul.f32.gmra.mxu0 %v72
    %v94 = vpop.f32.mrf.mxu0
    %v95 = vadd.f32 0.0, %v94
    %96 = vdwg.mxu0
    %v98 = vperm.slane %v60, 0
    %v100 = vmul.f32 %v92, %v98
    %v101 = vmul.f32 %v95, %v98
    %vm102 = vcmask 261120
    %v104 = vsel %vm102, %v100, 0
    %v107 = vsel %vm102, %v101, 0
    %109 = vmatpush.msra.mxu0 0.0
    %110 = vmatpush.msra.mxu0 0.0
    %111 = vmatpush.msra.mxu0 0.0
    %112 = vmatpush.msra.mxu0 0.0
    %113 = vmatpush.msra.mxu0 0.0
    %114 = vmatpush.msra.mxu0 0.0
    %115 = vmatpush.msra.mxu0 0.0
    %116 = vmatpush.msra.mxu0 0.0
    %117 = vmatpush.msra.mxu0 0.0
    %118 = vmatpush.msra.mxu0 0.0
    %119 = vmatpush.msra.mxu0 0.0
    %120 = vmatpush.msra.mxu0 0.0
    %121 = vmatpush.msra.mxu0 %v66
    %122 = vmatpush.msra.mxu0 %v65
    %123 = vmatpush.msra.mxu0 %v64
    %124 = vmatpush.msra.mxu0 %v63
    %125 = vmatmul.f32.gmra.mxu0 %v104
    %v126 = vpop.f32.mrf.mxu0
    %v127 = vadd.f32 0.0, %v126
    %128 = vmatmul.f32.gmra.mxu0 %v107
    %v129 = vpop.f32.mrf.mxu0
    %v130 = vadd.f32 0.0, %v129
    %131 = vdwg.mxu0
    %v133 = vperm.slane %v61, 0
    %v135 = vmul.f32 %v92, %v133
    %v136 = vmul.f32 %v95, %v133
    %v138 = vsel %vm102, %v135, 0
    %v141 = vsel %vm102, %v136, 0
    %143 = vmatpush.msra.mxu0 0.0
    %144 = vmatpush.msra.mxu0 0.0
    %145 = vmatpush.msra.mxu0 0.0
    %146 = vmatpush.msra.mxu0 0.0
    %147 = vmatpush.msra.mxu0 0.0
    %148 = vmatpush.msra.mxu0 0.0
    %149 = vmatpush.msra.mxu0 0.0
    %150 = vmatpush.msra.mxu0 0.0
    %151 = vmatpush.msra.mxu0 0.0
    %152 = vmatpush.msra.mxu0 0.0
    %153 = vmatpush.msra.mxu0 0.0
    %154 = vmatpush.msra.mxu0 0.0
    %155 = vmatpush.msra.mxu0 %v66
    %156 = vmatpush.msra.mxu0 %v65
    %157 = vmatpush.msra.mxu0 %v64
    %158 = vmatpush.msra.mxu0 %v63
    %159 = vmatmul.f32.gmra.mxu0 %v138
    %v160 = vpop.f32.mrf.mxu0
    %v161 = vadd.f32 0.0, %v160
    %162 = vmatmul.f32.gmra.mxu0 %v141
    %v163 = vpop.f32.mrf.mxu0
    %v164 = vadd.f32 0.0, %v163
    %165 = vdwg.mxu0
    %166 = vxpose.xlu0.b32.start [1/16] %v127, 128
    %167 = vxpose.xlu0.b32.cont [2/16] %v130, 128
    %168 = vxpose.xlu0.b32.cont [3/16] 0.0, 128
    %169 = vxpose.xlu0.b32.cont [4/16] 0.0, 128
    %170 = vxpose.xlu0.b32.cont [5/16] 0.0, 128
    %171 = vxpose.xlu0.b32.cont [6/16] 0.0, 128
    %172 = vxpose.xlu0.b32.cont [7/16] 0.0, 128
    %173 = vxpose.xlu0.b32.cont [8/16] 0.0, 128
    %174 = vxpose.xlu0.b32.cont [9/16] 0.0, 128
    %175 = vxpose.xlu0.b32.cont [10/16] 0.0, 128
    %176 = vxpose.xlu0.b32.cont [11/16] 0.0, 128
    %177 = vxpose.xlu0.b32.cont [12/16] 0.0, 128
    %178 = vxpose.xlu0.b32.cont [13/16] 0.0, 128
    %179 = vxpose.xlu0.b32.cont [14/16] 0.0, 128
    %180 = vxpose.xlu0.b32.cont [15/16] 0.0, 128
    %181 = vxpose.xlu0.b32.end [16/16] 0.0, 128
    %v182 = vpop.trf.xlu0
    %v183 = vpop.trf.xlu0
    %v184 = vpop.trf.xlu0
    %v185 = vpop.trf.xlu0
    %v186 = vpop.trf.xlu0
    %v187 = vpop.trf.xlu0
    %v188 = vpop.trf.xlu0
    %v189 = vpop.trf.xlu0
    %v190 = vpop.trf.xlu0
    %v191 = vpop.trf.xlu0
    %v192 = vpop.trf.xlu0
    %v193 = vpop.trf.xlu0
    %v194 = vpop.trf.xlu0
    %v195 = vpop.trf.xlu0
    %v196 = vpop.trf.xlu0
    %v197 = vpop.trf.xlu0
    %199 = vset.pattern.permute.xlu0 0
    %200 = vperm.xlu0 %199, %v161
    %v201 = vpop.permute.xlu0 %200
    %204 = vset.pattern.permute.xlu0 0
    %205 = vperm.xlu0 %204, %v164
    %v206 = vpop.permute.xlu0 %205
    %v208 = vperm.slane %v182, 0
    %v209 = vadd.f32 %v201, %v208
    %v210 = vadd.f32 %v206, %v208
    %vm211 = vcmp.gt.f32.partialorder %v209, 0.0
    %vm212 = vcmp.gt.f32.partialorder %v210, 0.0
    %v213 = vmul.f32 %v209, 0.2
    %v214 = vmul.f32 %v210, 0.2
    %v215 = vsel %vm211, %v209, %v213
    %v216 = vsel %vm212, %v210, %v214
    %vm217 = vcmp.gt.f32.partialorder %v54, 0.0
    %vm218 = vcmp.gt.f32.partialorder %v55, 0.0
    %v219 = vsel %vm217, %v215, -1e+30
    %v220 = vsel %vm218, %v216, -1e+30
    %v221 = vsel %vm67, %v219, -inf
    %222 = vmax.xlane.f32.xlu0 %v221
    %v223 = vpop.xlane.xlu0 %222
    %v224 = vsel %vm67, %v220, -inf
    %225 = vmax.xlane.f32.xlu0 %v224
    %v226 = vpop.xlane.xlu0 %225
    %v227 = vsub.f32 %v219, %v223
    %v228 = vsub.f32 %v220, %v226
    %v229 = vmul.f32 %v227, 1.442695
    %v230 = vpow.pop %v229
    %v231 = vmul.f32 %v228, 1.442695
    %v232 = vpow.pop %v231
    %v233 = vsel %vm67, %v230, 0.0
    %234 = vadd.xlane.f32.xlu0 %v233
    %v235 = vpop.xlane.xlu0 %234
    %v236 = vsel %vm67, %v232, 0.0
    %237 = vadd.xlane.f32.xlu0 %v236
    %v238 = vpop.xlane.xlu0 %237
    %v239 = vrcp.pop %v235
    %v240 = vrcp.pop %v238
    %v241 = vmul.f32 %v230, %v239
    %v242 = vmul.f32 %v232, %v240
    %v244 = vsel %vm67, %v241, 0
    %v247 = vsel %vm67, %v242, 0
    %249 = vmatpush.msra.mxu0 0.0
    %250 = vmatpush.msra.mxu0 0.0
    %251 = vmatpush.msra.mxu0 0.0
    %252 = vmatpush.msra.mxu0 0.0
    %253 = vmatpush.msra.mxu0 0.0
    %254 = vmatpush.msra.mxu0 0.0
    %255 = vmatpush.msra.mxu0 0.0
    %256 = vmatpush.msra.mxu0 0.0
    %257 = vmatpush.msra.mxu0 0.0
    %258 = vmatpush.msra.mxu0 0.0
    %259 = vmatpush.msra.mxu0 0.0
    %260 = vmatpush.msra.mxu0 0.0
    %261 = vmatpush.msra.mxu0 0.0
    %262 = vmatpush.msra.mxu0 0.0
    %263 = vmatpush.msra.mxu0 %v95
    %264 = vmatpush.msra.mxu0 %v92
    %265 = vmatmul.f32.gmra.mxu0 %v244
    %v266 = vpop.f32.mrf.mxu0
    %v267 = vadd.f32 0.0, %v266
    %268 = vmatmul.f32.gmra.mxu0 %v247
    %v269 = vpop.f32.mrf.mxu0
    %v270 = vadd.f32 0.0, %v269
    %271 = vdwg.mxu0
    %272 = vset.pattern.permute.xlu0 1
    %273 = vperm.xlu0 %272, %v161
    %v274 = vpop.permute.xlu0 %273
    %276 = vset.pattern.permute.xlu0 1
    %277 = vperm.xlu0 %276, %v164
    %v278 = vpop.permute.xlu0 %277
    %v280 = vperm.slane %v182, 1
    %v281 = vadd.f32 %v274, %v280
    %v282 = vadd.f32 %v278, %v280
    %vm283 = vcmp.gt.f32.partialorder %v281, 0.0
    %vm284 = vcmp.gt.f32.partialorder %v282, 0.0
    %v285 = vmul.f32 %v281, 0.2
    %v286 = vmul.f32 %v282, 0.2
    %v287 = vsel %vm283, %v281, %v285
    %v288 = vsel %vm284, %v282, %v286
    %v289 = vsel %vm217, %v287, -1e+30
    %v290 = vsel %vm218, %v288, -1e+30
    %v291 = vsel %vm67, %v289, -inf
    %292 = vmax.xlane.f32.xlu0 %v291
    %v293 = vpop.xlane.xlu0 %292
    %v294 = vsel %vm67, %v290, -inf
    %295 = vmax.xlane.f32.xlu0 %v294
    %v296 = vpop.xlane.xlu0 %295
    %v297 = vsub.f32 %v289, %v293
    %v298 = vsub.f32 %v290, %v296
    %v299 = vmul.f32 %v297, 1.442695
    %v300 = vpow.pop %v299
    %v301 = vmul.f32 %v298, 1.442695
    %v302 = vpow.pop %v301
    %v303 = vsel %vm67, %v300, 0.0
    %304 = vadd.xlane.f32.xlu0 %v303
    %v305 = vpop.xlane.xlu0 %304
    %v306 = vsel %vm67, %v302, 0.0
    %307 = vadd.xlane.f32.xlu0 %v306
    %v308 = vpop.xlane.xlu0 %307
    %v309 = vrcp.pop %v305
    %v310 = vrcp.pop %v308
    %v311 = vmul.f32 %v300, %v309
    %v312 = vmul.f32 %v302, %v310
    %315 = vrot.lane.b32.xlu0 %v92, 120
    %v316 = vpop.permute.xlu0 %315
    %317 = vrot.lane.b32.xlu0 %v95, 120
    %v318 = vpop.permute.xlu0 %317
    %v322 = vsel %vm67, %v311, 0
    %v325 = vsel %vm67, %v312, 0
    %327 = vmatpush.msra.mxu0 0.0
    %328 = vmatpush.msra.mxu0 0.0
    %329 = vmatpush.msra.mxu0 0.0
    %330 = vmatpush.msra.mxu0 0.0
    %331 = vmatpush.msra.mxu0 0.0
    %332 = vmatpush.msra.mxu0 0.0
    %333 = vmatpush.msra.mxu0 0.0
    %334 = vmatpush.msra.mxu0 0.0
    %335 = vmatpush.msra.mxu0 0.0
    %336 = vmatpush.msra.mxu0 0.0
    %337 = vmatpush.msra.mxu0 0.0
    %338 = vmatpush.msra.mxu0 0.0
    %339 = vmatpush.msra.mxu0 0.0
    %340 = vmatpush.msra.mxu0 0.0
    %341 = vmatpush.msra.mxu0 %v318
    %342 = vmatpush.msra.mxu0 %v316
    %343 = vmatmul.f32.gmra.mxu0 %v322
    %v344 = vpop.f32.mrf.mxu0
    %v345 = vadd.f32 0.0, %v344
    %346 = vmatmul.f32.gmra.mxu0 %v325
    %v347 = vpop.f32.mrf.mxu0
    %v348 = vadd.f32 0.0, %v347
    %349 = vdwg.mxu0
    %350 = vset.pattern.permute.xlu0 2
    %351 = vperm.xlu0 %350, %v161
    %v352 = vpop.permute.xlu0 %351
    %354 = vset.pattern.permute.xlu0 2
    %355 = vperm.xlu0 %354, %v164
    %v356 = vpop.permute.xlu0 %355
    %v358 = vperm.slane %v182, 2
    %v359 = vadd.f32 %v352, %v358
    %v360 = vadd.f32 %v356, %v358
    %vm361 = vcmp.gt.f32.partialorder %v359, 0.0
    %vm362 = vcmp.gt.f32.partialorder %v360, 0.0
    %v363 = vmul.f32 %v359, 0.2
    %v364 = vmul.f32 %v360, 0.2
    %v365 = vsel %vm361, %v359, %v363
    %v366 = vsel %vm362, %v360, %v364
    %v367 = vsel %vm217, %v365, -1e+30
    %v368 = vsel %vm218, %v366, -1e+30
    %v369 = vsel %vm67, %v367, -inf
    %370 = vmax.xlane.f32.xlu0 %v369
    %v371 = vpop.xlane.xlu0 %370
    %v372 = vsel %vm67, %v368, -inf
    %373 = vmax.xlane.f32.xlu0 %v372
    %v374 = vpop.xlane.xlu0 %373
    %v375 = vsub.f32 %v367, %v371
    %v376 = vsub.f32 %v368, %v374
    %v377 = vmul.f32 %v375, 1.442695
    %v378 = vpow.pop %v377
    %v379 = vmul.f32 %v376, 1.442695
    %v380 = vpow.pop %v379
    %v381 = vsel %vm67, %v378, 0.0
    %382 = vadd.xlane.f32.xlu0 %v381
    %v383 = vpop.xlane.xlu0 %382
    %v384 = vsel %vm67, %v380, 0.0
    %385 = vadd.xlane.f32.xlu0 %v384
    %v386 = vpop.xlane.xlu0 %385
    %v387 = vrcp.pop %v383
    %v388 = vrcp.pop %v386
    %v389 = vmul.f32 %v378, %v387
    %v390 = vmul.f32 %v380, %v388
    %391 = vrot.lane.b32.xlu0 %v92, 112
    %v392 = vpop.permute.xlu0 %391
    %393 = vrot.lane.b32.xlu0 %v95, 112
    %v394 = vpop.permute.xlu0 %393
    %v398 = vsel %vm67, %v389, 0
    %v401 = vsel %vm67, %v390, 0
    %403 = vmatpush.msra.mxu0 0.0
    %404 = vmatpush.msra.mxu0 0.0
    %405 = vmatpush.msra.mxu0 0.0
    %406 = vmatpush.msra.mxu0 0.0
    %407 = vmatpush.msra.mxu0 0.0
    %408 = vmatpush.msra.mxu0 0.0
    %409 = vmatpush.msra.mxu0 0.0
    %410 = vmatpush.msra.mxu0 0.0
    %411 = vmatpush.msra.mxu0 0.0
    %412 = vmatpush.msra.mxu0 0.0
    %413 = vmatpush.msra.mxu0 0.0
    %414 = vmatpush.msra.mxu0 0.0
    %415 = vmatpush.msra.mxu0 0.0
    %416 = vmatpush.msra.mxu0 0.0
    %417 = vmatpush.msra.mxu0 %v394
    %418 = vmatpush.msra.mxu0 %v392
    %419 = vmatmul.f32.gmra.mxu0 %v398
    %v420 = vpop.f32.mrf.mxu0
    %v421 = vadd.f32 0.0, %v420
    %422 = vmatmul.f32.gmra.mxu0 %v401
    %v423 = vpop.f32.mrf.mxu0
    %v424 = vadd.f32 0.0, %v423
    %425 = vdwg.mxu0
    %426 = vset.pattern.permute.xlu0 3
    %427 = vperm.xlu0 %426, %v161
    %v428 = vpop.permute.xlu0 %427
    %430 = vset.pattern.permute.xlu0 3
    %431 = vperm.xlu0 %430, %v164
    %v432 = vpop.permute.xlu0 %431
    %v434 = vperm.slane %v182, 3
    %v435 = vadd.f32 %v428, %v434
    %v436 = vadd.f32 %v432, %v434
    %vm437 = vcmp.gt.f32.partialorder %v435, 0.0
    %vm438 = vcmp.gt.f32.partialorder %v436, 0.0
    %v439 = vmul.f32 %v435, 0.2
    %v440 = vmul.f32 %v436, 0.2
    %v441 = vsel %vm437, %v435, %v439
    %v442 = vsel %vm438, %v436, %v440
    %v443 = vsel %vm217, %v441, -1e+30
    %v444 = vsel %vm218, %v442, -1e+30
    %v445 = vsel %vm67, %v443, -inf
    %446 = vmax.xlane.f32.xlu0 %v445
    %v447 = vpop.xlane.xlu0 %446
    %v448 = vsel %vm67, %v444, -inf
    %449 = vmax.xlane.f32.xlu0 %v448
    %v450 = vpop.xlane.xlu0 %449
    %v451 = vsub.f32 %v443, %v447
    %v452 = vsub.f32 %v444, %v450
    %v453 = vmul.f32 %v451, 1.442695
    %v454 = vpow.pop %v453
    %v455 = vmul.f32 %v452, 1.442695
    %v456 = vpow.pop %v455
    %v457 = vsel %vm67, %v454, 0.0
    %458 = vadd.xlane.f32.xlu0 %v457
    %v459 = vpop.xlane.xlu0 %458
    %v460 = vsel %vm67, %v456, 0.0
    %461 = vadd.xlane.f32.xlu0 %v460
    %v462 = vpop.xlane.xlu0 %461
    %v463 = vrcp.pop %v459
    %v464 = vrcp.pop %v462
    %v465 = vmul.f32 %v454, %v463
    %v466 = vmul.f32 %v456, %v464
    %467 = vrot.lane.b32.xlu0 %v92, 104
    %v468 = vpop.permute.xlu0 %467
    %469 = vrot.lane.b32.xlu0 %v95, 104
    %v470 = vpop.permute.xlu0 %469
    %v474 = vsel %vm67, %v465, 0
    %v477 = vsel %vm67, %v466, 0
    %479 = vmatpush.msra.mxu0 0.0
    %480 = vmatpush.msra.mxu0 0.0
    %481 = vmatpush.msra.mxu0 0.0
    %482 = vmatpush.msra.mxu0 0.0
    %483 = vmatpush.msra.mxu0 0.0
    %484 = vmatpush.msra.mxu0 0.0
    %485 = vmatpush.msra.mxu0 0.0
    %486 = vmatpush.msra.mxu0 0.0
    %487 = vmatpush.msra.mxu0 0.0
    %488 = vmatpush.msra.mxu0 0.0
    %489 = vmatpush.msra.mxu0 0.0
    %490 = vmatpush.msra.mxu0 0.0
    %491 = vmatpush.msra.mxu0 0.0
    %492 = vmatpush.msra.mxu0 0.0
    %493 = vmatpush.msra.mxu0 %v470
    %494 = vmatpush.msra.mxu0 %v468
    %495 = vmatmul.f32.gmra.mxu0 %v474
    %v496 = vpop.f32.mrf.mxu0
    %v497 = vadd.f32 0.0, %v496
    %498 = vmatmul.f32.gmra.mxu0 %v477
    %v499 = vpop.f32.mrf.mxu0
    %v500 = vadd.f32 0.0, %v499
    %501 = vdwg.mxu0
    %504 = vrot.lane.b32.xlu0 %v345, 8
    %v505 = vpop.permute.xlu0 %504
    %506 = vrot.lane.b32.xlu0 %v348, 8
    %v507 = vpop.permute.xlu0 %506
    %512 = vrot.lane.b32.xlu0 %v421, 16
    %v513 = vpop.permute.xlu0 %512
    %514 = vrot.lane.b32.xlu0 %v424, 16
    %v515 = vpop.permute.xlu0 %514
    %520 = vrot.lane.b32.xlu0 %v497, 24
    %v521 = vpop.permute.xlu0 %520
    %522 = vrot.lane.b32.xlu0 %v500, 24
    %v523 = vpop.permute.xlu0 %522
    %vm526 = vcmask 64512
    %v527 = vsel %vm526, %v267, %v505
    %v528 = vsel %vm526, %v270, %v507
    %v529 = vsel %vm67, %v527, %v513
    %v530 = vsel %vm67, %v528, %v515
    %vm531 = vcmask 195584
    %v532 = vsel %vm531, %v529, %v521
    %v533 = vsel %vm531, %v530, %v523
    %v535 = vperm.slane %v62, 0
    %v537 = vadd.f32 %v532, %v535
    %v538 = vadd.f32 %v533, %v535
    %vm539 = vcmp.gt.f32.partialorder %v537, 0.0
    %vm540 = vcmp.gt.f32.partialorder %v538, 0.0
    %v541 = vmin.f32 %v537, 0.0
    %v542 = vmin.f32 %v538, 0.0
    %v543 = vmul.f32 %v541, 1.442695
    %v544 = vpow.pop %v543
    %v545 = vmul.f32 %v542, 1.442695
    %v546 = vpow.pop %v545
    %v547 = vsub.f32 %v544, 1.0
    %v548 = vsub.f32 %v546, 1.0
    %v549 = vsel %vm539, %v537, %v547
    %v550 = vsel %vm540, %v538, %v548
    %v551 = vld [vmem:[%s8] sm:$0xff]
    %v552 = vld [vmem:[%s8 + $0x8] sm:$0xff]
    %v553 = vld [vmem:[%s8 + $0x10] sm:$0xff]
    %v554 = vld [vmem:[%s8 + $0x18] sm:$0xff]
    %v555 = vld [vmem:[%s9] sm:$0x1]
    %v556 = vld [vmem:[%s10] sm:$0x1]
    %v557 = vld [vmem:[%s11] sm:$0x1]
    %v559 = vsel %vm102, %v549, 0
    %v562 = vsel %vm102, %v550, 0
    %564 = vmatpush.msra.mxu0 0.0
    %565 = vmatpush.msra.mxu0 0.0
    %566 = vmatpush.msra.mxu0 0.0
    %567 = vmatpush.msra.mxu0 0.0
    %568 = vmatpush.msra.mxu0 0.0
    %569 = vmatpush.msra.mxu0 0.0
    %570 = vmatpush.msra.mxu0 0.0
    %571 = vmatpush.msra.mxu0 0.0
    %572 = vmatpush.msra.mxu0 0.0
    %573 = vmatpush.msra.mxu0 0.0
    %574 = vmatpush.msra.mxu0 0.0
    %575 = vmatpush.msra.mxu0 0.0
    %576 = vmatpush.msra.mxu0 %v554
    %577 = vmatpush.msra.mxu0 %v553
    %578 = vmatpush.msra.mxu0 %v552
    %579 = vmatpush.msra.mxu0 %v551
    %580 = vmatmul.f32.gmra.mxu0 %v559
    %v581 = vpop.f32.mrf.mxu0
    %v582 = vadd.f32 0.0, %v581
    %583 = vmatmul.f32.gmra.mxu0 %v562
    %v584 = vpop.f32.mrf.mxu0
    %v585 = vadd.f32 0.0, %v584
    %586 = vdwg.mxu0
    %v588 = vperm.slane %v555, 0
    %v590 = vmul.f32 %v582, %v588
    %v591 = vmul.f32 %v585, %v588
    %v592 = vsel %vm526, %v590, 0.0
    %593 = vadd.xlane.f32.xlu0 %v592
    %v594 = vpop.xlane.xlu0 %593
    %v595 = vsel %vm526, %v591, 0.0
    %596 = vadd.xlane.f32.xlu0 %v595
    %v597 = vpop.xlane.xlu0 %596
    %v599 = vperm.slane %v556, 0
    %v601 = vmul.f32 %v582, %v599
    %v602 = vmul.f32 %v585, %v599
    %v603 = vsel %vm526, %v601, 0.0
    %604 = vadd.xlane.f32.xlu0 %v603
    %v605 = vpop.xlane.xlu0 %604
    %v606 = vsel %vm526, %v602, 0.0
    %607 = vadd.xlane.f32.xlu0 %v606
    %v608 = vpop.xlane.xlu0 %607
    %609 = vxpose.xlu0.b32.start [1/16] %v594, 128
    %610 = vxpose.xlu0.b32.cont [2/16] %v597, 128
    %611 = vxpose.xlu0.b32.cont [3/16] 0.0, 128
    %612 = vxpose.xlu0.b32.cont [4/16] 0.0, 128
    %613 = vxpose.xlu0.b32.cont [5/16] 0.0, 128
    %614 = vxpose.xlu0.b32.cont [6/16] 0.0, 128
    %615 = vxpose.xlu0.b32.cont [7/16] 0.0, 128
    %616 = vxpose.xlu0.b32.cont [8/16] 0.0, 128
    %617 = vxpose.xlu0.b32.cont [9/16] 0.0, 128
    %618 = vxpose.xlu0.b32.cont [10/16] 0.0, 128
    %619 = vxpose.xlu0.b32.cont [11/16] 0.0, 128
    %620 = vxpose.xlu0.b32.cont [12/16] 0.0, 128
    %621 = vxpose.xlu0.b32.cont [13/16] 0.0, 128
    %622 = vxpose.xlu0.b32.cont [14/16] 0.0, 128
    %623 = vxpose.xlu0.b32.cont [15/16] 0.0, 128
    %624 = vxpose.xlu0.b32.end [16/16] 0.0, 128
    %v625 = vpop.trf.xlu0
    %v626 = vpop.trf.xlu0
    %v627 = vpop.trf.xlu0
    %v628 = vpop.trf.xlu0
    %v629 = vpop.trf.xlu0
    %v630 = vpop.trf.xlu0
    %v631 = vpop.trf.xlu0
    %v632 = vpop.trf.xlu0
    %v633 = vpop.trf.xlu0
    %v634 = vpop.trf.xlu0
    %v635 = vpop.trf.xlu0
    %v636 = vpop.trf.xlu0
    %v637 = vpop.trf.xlu0
    %v638 = vpop.trf.xlu0
    %v639 = vpop.trf.xlu0
    %v640 = vpop.trf.xlu0
    %v641 = vperm.slane %v625, 0
    %v642 = vadd.f32 %v605, %v641
    %v643 = vadd.f32 %v608, %v641
    %vm644 = vcmp.gt.f32.partialorder %v642, 0.0
    %vm645 = vcmp.gt.f32.partialorder %v643, 0.0
    %v646 = vmul.f32 %v642, 0.2
    %v647 = vmul.f32 %v643, 0.2
    %v648 = vsel %vm644, %v642, %v646
    %v649 = vsel %vm645, %v643, %v647
    %v650 = vsel %vm217, %v648, -1e+30
    %v651 = vsel %vm218, %v649, -1e+30
    %v652 = vsel %vm67, %v650, -inf
    %653 = vmax.xlane.f32.xlu0 %v652
    %v654 = vpop.xlane.xlu0 %653
    %v655 = vsel %vm67, %v651, -inf
    %656 = vmax.xlane.f32.xlu0 %v655
    %v657 = vpop.xlane.xlu0 %656
    %v658 = vsub.f32 %v650, %v654
    %v659 = vsub.f32 %v651, %v657
    %v660 = vmul.f32 %v658, 1.442695
    %v661 = vpow.pop %v660
    %v662 = vmul.f32 %v659, 1.442695
    %v663 = vpow.pop %v662
    %v664 = vsel %vm67, %v661, 0.0
    %665 = vadd.xlane.f32.xlu0 %v664
    %v666 = vpop.xlane.xlu0 %665
    %v667 = vsel %vm67, %v663, 0.0
    %668 = vadd.xlane.f32.xlu0 %v667
    %v669 = vpop.xlane.xlu0 %668
    %v670 = vrcp.pop %v666
    %v671 = vrcp.pop %v669
    %v672 = vmul.f32 %v661, %v670
    %v673 = vmul.f32 %v663, %v671
    %v675 = vperm.slane %v557, 0
    %v678 = vsel %vm67, %v672, 0
    %v681 = vsel %vm67, %v673, 0
    %683 = vmatpush.msra.mxu0 0.0
    %684 = vmatpush.msra.mxu0 0.0
    %685 = vmatpush.msra.mxu0 0.0
    %686 = vmatpush.msra.mxu0 0.0
    %687 = vmatpush.msra.mxu0 0.0
    %688 = vmatpush.msra.mxu0 0.0
    %689 = vmatpush.msra.mxu0 0.0
    %690 = vmatpush.msra.mxu0 0.0
    %691 = vmatpush.msra.mxu0 0.0
    %692 = vmatpush.msra.mxu0 0.0
    %693 = vmatpush.msra.mxu0 0.0
    %694 = vmatpush.msra.mxu0 0.0
    %695 = vmatpush.msra.mxu0 0.0
    %696 = vmatpush.msra.mxu0 0.0
    %697 = vmatpush.msra.mxu0 %v585
    %698 = vmatpush.msra.mxu0 %v582
    %699 = vmatmul.f32.gmra.mxu0 %v678
    %v700 = vpop.f32.mrf.mxu0
    %v701 = vadd.f32 %v675, %v700
    %702 = vmatmul.f32.gmra.mxu0 %v681
    %v703 = vpop.f32.mrf.mxu0
    %v704 = vadd.f32 %v675, %v703
    %705 = vdwg.mxu0
    %vm706 = vcmp.gt.f32.partialorder %v701, 0.0
    %vm707 = vcmp.gt.f32.partialorder %v704, 0.0
    %v708 = vmin.f32 %v701, 0.0
    %v709 = vmin.f32 %v704, 0.0
    %v710 = vmul.f32 %v708, 1.442695
    %v711 = vpow.pop %v710
    %v712 = vmul.f32 %v709, 1.442695
    %v713 = vpow.pop %v712
    %v714 = vsub.f32 %v711, 1.0
    %v715 = vsub.f32 %v713, 1.0
    %v716 = vsel %vm706, %v701, %v714
    %v717 = vsel %vm707, %v704, %v715
    %v718 = vld [vmem:[%s2] sm:$0x3]
    %v720 = vsel %vm67, %v718, 0
    %722 = vmatpush.msra.mxu0 0.0
    %723 = vmatpush.msra.mxu0 0.0
    %724 = vmatpush.msra.mxu0 0.0
    %725 = vmatpush.msra.mxu0 0.0
    %726 = vmatpush.msra.mxu0 0.0
    %727 = vmatpush.msra.mxu0 0.0
    %728 = vmatpush.msra.mxu0 0.0
    %729 = vmatpush.msra.mxu0 0.0
    %730 = vmatpush.msra.mxu0 0.0
    %731 = vmatpush.msra.mxu0 0.0
    %732 = vmatpush.msra.mxu0 0.0
    %733 = vmatpush.msra.mxu0 0.0
    %734 = vmatpush.msra.mxu0 0.0
    %735 = vmatpush.msra.mxu0 0.0
    %736 = vmatpush.msra.mxu0 %v717
    %737 = vmatpush.msra.mxu0 %v716
    %738 = vmatmul.f32.gmra.mxu0 %v720
    %v739 = vpop.f32.mrf.mxu0
    %v740 = vadd.f32 0.0, %v739
    %741 = vdwg.mxu0
    %v742 = vld [vmem:[%s12] sm:$0xff]
    %v743 = vld [vmem:[%s13] sm:$0x1]
    %v745 = vperm.slane %v743, 0
    %v748 = vsel %vm526, %v740, 0
    %750 = vmatpush.msra.mxu0 0.0
    %751 = vmatpush.msra.mxu0 0.0
    %752 = vmatpush.msra.mxu0 0.0
    %753 = vmatpush.msra.mxu0 0.0
    %754 = vmatpush.msra.mxu0 0.0
    %755 = vmatpush.msra.mxu0 0.0
    %756 = vmatpush.msra.mxu0 0.0
    %757 = vmatpush.msra.mxu0 0.0
    %758 = vmatpush.msra.mxu0 0.0
    %759 = vmatpush.msra.mxu0 0.0
    %760 = vmatpush.msra.mxu0 0.0
    %761 = vmatpush.msra.mxu0 0.0
    %762 = vmatpush.msra.mxu0 0.0
    %763 = vmatpush.msra.mxu0 0.0
    %764 = vmatpush.msra.mxu0 0.0
    %765 = vmatpush.msra.mxu0 %v742
    %766 = vmatmul.f32.gmra.mxu0 %v748
    %v767 = vpop.f32.mrf.mxu0
    %v768 = vadd.f32 %v745, %v767
    %769 = vdwg.mxu0
    %vm770 = vcmp.gt.f32.partialorder %v768, 0.0
    %v771 = vmin.f32 %v768, 0.0
    %v772 = vmul.f32 %v771, 1.442695
    %v773 = vpow.pop %v772
    %v774 = vsub.f32 %v773, 1.0
    %v775 = vsel %vm770, %v768, %v774
    %v776 = vld [vmem:[%s14] sm:$0xff]
    %v777 = vld [vmem:[%s15] sm:$0x1]
    %v779 = vperm.slane %v777, 0
    %v782 = vsel %vm526, %v775, 0
    %784 = vmatpush.msra.mxu0 0.0
    %785 = vmatpush.msra.mxu0 0.0
    %786 = vmatpush.msra.mxu0 0.0
    %787 = vmatpush.msra.mxu0 0.0
    %788 = vmatpush.msra.mxu0 0.0
    %789 = vmatpush.msra.mxu0 0.0
    %790 = vmatpush.msra.mxu0 0.0
    %791 = vmatpush.msra.mxu0 0.0
    %792 = vmatpush.msra.mxu0 0.0
    %793 = vmatpush.msra.mxu0 0.0
    %794 = vmatpush.msra.mxu0 0.0
    %795 = vmatpush.msra.mxu0 0.0
    %796 = vmatpush.msra.mxu0 0.0
    %797 = vmatpush.msra.mxu0 0.0
    %798 = vmatpush.msra.mxu0 0.0
    %799 = vmatpush.msra.mxu0 %v776
    %800 = vmatmul.f32.gmra.mxu0 %v782
    %v801 = vpop.f32.mrf.mxu0
    %v802 = vadd.f32 %v779, %v801
    %803 = vdwg.mxu0
    %vm804 = vcmask 25600
    %v805 = vsel %vm804, %v802, -inf
    %806 = vmax.xlane.f32.xlu0 %v805
    %v807 = vpop.xlane.xlu0 %806
    %v808 = vsub.f32 %v802, %v807
    %v809 = vmul.f32 %v808, 1.442695
    %v810 = vpow.pop %v809
    %v811 = vsel %vm804, %v810, 0.0
    %812 = vadd.xlane.f32.xlu0 %v811
    %v813 = vpop.xlane.xlu0 %812
    %v814 = vlog2.pop %v813
    %v815 = vmul.f32 %v814, 0.6931472
    %v816 = vsub.f32 %v808, %v815
    %817 = vst.msk [vmem:[#allocation2] sm:$0x3] %vm804, %v816
    // Predicated region
    $region66: #{tpu_custom_call.1} parent=1 // pred_check
      _
    $region67: #{tpu_custom_call.1} parent=1 // pred_check_branch
      %819 = sbr.rel (0) target = $region69
    $region68: #{tpu_custom_call.1} parent=1 // pred_region
      %821 = vsyncadd [#allocation3], 0
      %s823 = sshll.u32 [#allocation2], 4
      %s824 = int_to_ptr.vmem [resolvable:$true] %s823
      %s825 = sshll.u32 %s16, 4
      %s826 = int_to_ptr.hbm [resolvable:$true] %s825
      %828 = dma.vmem_to_hbm [thread:$0]  %s824, 32, %s826, [#allocation3]
    $region69: #{tpu_custom_call.1} parent=1 // pred_fallthru
      _
    // Predicated region
    $region70: #{tpu_custom_call.1} parent=1 // pred_check
      _
    $region71: #{tpu_custom_call.1} parent=1 // pred_check_branch
      %830 = sbr.rel (0) target = $region73
    $region72: #{tpu_custom_call.1} parent=1 // pred_region
      %832 = dma.done [#allocation3], 32
    $region73: #{tpu_custom_call.1} parent=1 // pred_fallthru
      _
    %833 = vsyncpa [#allocation3], 1

</llo_original>
